<compile_context>
chip_gen: v5e
topology: v5e:2x2
jax: 0.10.0
libtpu: 0.0.40
codegen_flags: <defaults>
</compile_context>

<pallas_src>
import functools

import jax
import jax.numpy as jnp
from jax.experimental import pallas as pl
from jax.experimental.pallas import tpu as pltpu


def _residual_fused_kernel(x_ref, o_ref, *, fn):
    # x_ref: (C, T_HW) tile of one batch element; fn is elementwise/tile-local.
    x = x_ref[...]
    o_ref[...] = (fn(x) + x).astype(o_ref.dtype)


def _residual_add_kernel(y_ref, x_ref, o_ref):
    # Residual add only (fn(x) already computed outside the kernel).
    o_ref[...] = (y_ref[...] + x_ref[...]).astype(o_ref.dtype)


def _choose_spatial_tile(HW, C, itemsize, vmem_budget_per_buf=2 * 1024 * 1024):
    """Pick a lane-dense spatial tile that divides HW and bounds VMEM per buffer."""
    if HW % 128 != 0:
        # Full-extent block sidesteps the (8,128) divisibility constraint.
        return HW
    cap = max(128, (vmem_budget_per_buf // max(1, C * itemsize)) // 128 * 128)
    t = min(cap, HW)
    t = (t // 128) * 128
    while HW % t != 0:
        t -= 128
    return t


def residual(x, fn=lambda t: t, *, fuse_fn=True):
    """Residual.forward: fn(x) + x for NCHW input x.

    fuse_fn=True : fn must be an elementwise, tile-local JAX function; it is
                   applied inside the Pallas kernel (single HBM round trip).
    fuse_fn=False: fn(x) is computed with plain JAX/XLA and only the residual
                   add runs as a Pallas kernel.
    """
    N, C, H, W = x.shape
    HW = H * W
    x3 = x.reshape(N, C, HW)

    T_HW = _choose_spatial_tile(HW, C, x.dtype.itemsize)
    grid = (N, HW // T_HW)
    tile_spec = pl.BlockSpec((None, C, T_HW), lambda i, j: (i, 0, j))

    if fuse_fn:
        kernel = functools.partial(_residual_fused_kernel, fn=fn)
        in_arrays = (x3,)
        in_specs = [tile_spec]
    else:
        # TODO(synk): non-elementwise fn submodules (conv/attention blocks)
        # stay in XLA; only the residual add is fused here.
        y3 = fn(x).reshape(N, C, HW)
        kernel = _residual_add_kernel
        in_arrays = (y3, x3)
        in_specs = [tile_spec, tile_spec]

    out = pl.pallas_call(
        kernel,
        out_shape=jax.ShapeDtypeStruct((N, C, HW), x.dtype),
        grid_spec=pltpu.PrefetchScalarGridSpec(
            num_scalar_prefetch=0,
            grid=grid,
            in_specs=in_specs,
            out_specs=tile_spec,
        ),
        compiler_params=pltpu.CompilerParams(
            dimension_semantics=("parallel", "parallel")),
    )(*in_arrays)

    return out.reshape(N, C, H, W)


if __name__ == "__main__":
    key = jax.random.PRNGKey(0)
    N, C, H, W = 2, 4, 16, 16

    x = jax.random.normal(key, (N, C, H, W), dtype=jnp.float32)

    # Example fn for Residual(fn): an elementwise GELU (tile-local, fusable).
    fn = jax.nn.gelu

    out_fused = jax.block_until_ready(residual(x, fn, fuse_fn=True))
    out_unfused = jax.block_until_ready(residual(x, fn, fuse_fn=False))

    # Pure-JAX reference: same semantics as Residual.forward = fn(x) + x.
    ref = fn(x) + x

    assert out_fused.shape == (N, C, H, W)
    assert jnp.allclose(out_fused, ref, atol=1e-5, rtol=1e-5), "fused mismatch"
    assert jnp.allclose(out_unfused, ref, atol=1e-5, rtol=1e-5), "unfused mismatch"

    print("KERNEL_OK")
</pallas_src>

<mosaic_0001>
module attributes {stable_mosaic.version = 11 : i64} {
  func.func @_residual_fused_kernel(%arg0: i32, %arg1: i32, %arg2: memref<1x4x256xf32, #tpu.memory_space<vmem>>, %arg3: memref<1x4x256xf32, #tpu.memory_space<vmem>>) attributes {dimension_semantics = [#tpu.dimension_semantics<parallel>, #tpu.dimension_semantics<parallel>], iteration_bounds = array<i64: 2, 1>, scalar_prefetch = 0 : i64, scratch_operands = 0 : i64, tpu.core_type = #tpu.core_type<tc>, window_params = [{transform_indices = @transform_0, window_bounds = array<i64: 1, 4, 256>}, {transform_indices = @transform_1, window_bounds = array<i64: 1, 4, 256>}]} {
    %c0 = arith.constant 0 : index
    %c0_0 = arith.constant 0 : index
    %c0_1 = arith.constant 0 : index
    %0 = vector.load %arg2[%c0, %c0_0, %c0_1] : memref<1x4x256xf32, #tpu.memory_space<vmem>>, vector<1x4x256xf32>
    %1 = vector.shape_cast %0 : vector<1x4x256xf32> to vector<4x256xf32>
    %2 = arith.mulf %1, %1 : vector<4x256xf32>
    %3 = arith.mulf %1, %2 : vector<4x256xf32>
    %cst = arith.constant 4.471500e-02 : f32
    %4 = vector.broadcast %cst : f32 to vector<4x256xf32>
    %5 = arith.mulf %4, %3 : vector<4x256xf32>
    %6 = arith.addf %1, %5 : vector<4x256xf32>
    %cst_2 = arith.constant 0.797884583 : f32
    %7 = vector.broadcast %cst_2 : f32 to vector<4x256xf32>
    %8 = arith.mulf %7, %6 : vector<4x256xf32>
    %9 = math.tanh %8 : vector<4x256xf32>
    %cst_3 = arith.constant 1.000000e+00 : f32
    %10 = vector.broadcast %cst_3 : f32 to vector<4x256xf32>
    %11 = arith.addf %10, %9 : vector<4x256xf32>
    %cst_4 = arith.constant 5.000000e-01 : f32
    %12 = vector.broadcast %cst_4 : f32 to vector<4x256xf32>
    %13 = arith.mulf %12, %11 : vector<4x256xf32>
    %14 = arith.mulf %1, %13 : vector<4x256xf32>
    %15 = arith.addf %14, %1 : vector<4x256xf32>
    %c0_5 = arith.constant 0 : index
    %c0_6 = arith.constant 0 : index
    %c0_7 = arith.constant 0 : index
    %16 = vector.load %arg3[%c0_5, %c0_6, %c0_7] : memref<1x4x256xf32, #tpu.memory_space<vmem>>, vector<1x4x256xf32>
    %17 = vector.shape_cast %16 : vector<1x4x256xf32> to vector<4x256xf32>
    %18 = vector.shape_cast %15 : vector<4x256xf32> to vector<1x4x256xf32>
    tpu.vector_store %arg3[%c0_5, %c0_6, %c0_7], %18 {strides = array<i32>} : memref<1x4x256xf32, #tpu.memory_space<vmem>>, vector<1x4x256xf32>,
    return
  }
  func.func @transform_0(%arg0: i32, %arg1: i32) -> (i32, i32, i32) {
    %c0_i32 = arith.constant 0 : i32
    %c0_i32_0 = arith.constant 0 : i32
    return %arg0, %c0_i32, %arg1 : i32, i32, i32
  }
  func.func @transform_1(%arg0: i32, %arg1: i32) -> (i32, i32, i32) {
    %c0_i32 = arith.constant 0 : i32
    %c0_i32_0 = arith.constant 0 : i32
    return %arg0, %c0_i32, %arg1 : i32, i32, i32
  }
}

</mosaic_0001>

<llo_original>
// kernel: tpu_custom_call.1
$region0: #{tpu_custom_call.1}
  #allocation0 [shape = 'u32[]', space=smem, size = 0x4, offset = 0x4, fixed_abs, tag = 'smem constant byte address 0x4 - core index']
  #allocation1 [shape = 'u32[72,128]{1,0:T(1,128)}', space=vmem, size = 0x9000, scoped, tag = 'internal scratch']
  %s0 = inlined_call_operand.hbm [shape: f32[2,4,256], index: 0, kind: input, shape index: {}]
  %s1 = inlined_call_operand.hbm [shape: f32[2,4,256], index: 1, kind: output, shape index: {}]
  %s2 = sld [smem:[#allocation0]]
  $region41: #{tpu_custom_call.1} parent=0
    _
  %s4 = ssub.s32 1, %s2
  %s5 = scalar_select 0, %s4, %s2
  $region1: #{tpu_custom_call.1} parent=0
    #allocation2 [shape = 'u8[8192]{0}', space=vmem, size = 0x2000, scoped, tag = 'input window, operand 0']
    #allocation3 [shape = 's32[2]{0}', space=sflag, size = 0x8, scoped, tag = 'scoped memory for tpu_custom_call.1']
    #allocation4 [shape = 's32[2]{0}', space=sflag, size = 0x8, scoped, tag = 'scoped memory for tpu_custom_call.1']
    #allocation5 [shape = 'u8[8192]{0}', space=vmem, size = 0x2000, scoped, tag = 'output window, operand 0']
    %6 = vsyncpa [#allocation3], 0
    %s7 = scalar_lea.sflag [#allocation3], 1
    %8 = vsyncpa %s7, 0
    %9 = vsyncpa [#allocation4], 0
    %s10 = scalar_lea.sflag [#allocation4], 1
    %11 = vsyncpa %s10, 0
    loop: start=0, step=1, limit=4
    $region2: #{tpu_custom_call.1} parent=1 // loop_pre_header
      _
    $region3: #{tpu_custom_call.1} parent=1 // loop_header
      %s13 = sphi 0, %s17
      %p14 = scmp.ge.s32.totalorder %s13, 4
      %s20 = sphi 0, %s32
      %s21 = sphi 0, %s28
      %s22 = sphi 0, %s20
      %s23 = sphi 0, %s21
      %s24 = sphi 0, %s22
      %s25 = sphi 0, %s23
      %s37 = sphi 0, %s39
      %s40 = sphi 0, %s37
      %s41 = sphi 0, %s40
      %s57 = sphi 0, %s41
      %s65 = sphi 0, %s67
      %s68 = sphi 0, %s65
      %s69 = sphi 0, %s68
      %s85 = sphi 0, %s69
    $region4: #{tpu_custom_call.1} parent=1 // loop_header_branch
      %16 = sbr.rel (%p14) target = $region8
    $region5: #{tpu_custom_call.1} parent=1 // loop_body
      %s18 = ssub.s32 %s13, 1
      %s19 = ssub.s32 %s13, 2
      %s26 = sadd.s32 1, %s21
      %p27 = scmp.ge.s32.totalorder %s26, 1
      %s28 = scalar_select %p27, 0, %s26
      %s29 = sadd.s32 1, %s20
      %s30 = scalar_select %p27, %s29, %s20
      %p31 = scmp.ge.s32.totalorder %s30, 2
      %s32 = scalar_select %p31, 0, %s30
      %s33 = ssub.s32 %s20, %s32
      %s34 = ssub.s32 %s21, %s28
      %s35 = sor.u32 %s33, %s34
      %p36 = scmp.eq.s32.totalorder %s35, 0
      %s38 = sadd.s32 %s37, 1
      %s39 = scalar_select %p36, %s37, %s38
      %p42 = pneg %p36
      %p43 = scmp.eq.s32.totalorder %s13, 1
      %p44 = por %p42, %p43
      %p45 = scmp.ne.s32.totalorder %s37, %s40
      %p46 = scmp.eq.s32.totalorder %s13, 0
      %p47 = por %p45, %p46
      %p48 = scmp.ne.s32.totalorder %s37, %s40
      %p49 = scmp.eq.s32.totalorder %s18, 1
      %p50 = por %p48, %p49
      %p51 = scmp.ne.s32.totalorder %s40, %s41
      %p52 = scmp.eq.s32.totalorder %s18, 0
      %p53 = por %p51, %p52
      %p54 = scmp.ne.s32.totalorder %s40, %s41
      %p55 = scmp.eq.s32.totalorder %s19, 1
      %p56 = por %p54, %p55
      %p58 = scmp.ne.s32.totalorder %s41, %s57
      %p59 = scmp.eq.s32.totalorder %s19, 0
      %p60 = por %p58, %p59
      %s61 = ssub.s32 %s20, %s32
      %s62 = ssub.s32 %s21, %s28
      %s63 = sor.u32 %s61, %s62
      %p64 = scmp.eq.s32.totalorder %s63, 0
      %s66 = sadd.s32 %s65, 1
      %s67 = scalar_select %p64, %s65, %s66
      %p70 = pneg %p64
      %p71 = scmp.eq.s32.totalorder %s13, 1
      %p72 = por %p70, %p71
      %p73 = scmp.ne.s32.totalorder %s65, %s68
      %p74 = scmp.eq.s32.totalorder %s13, 0
      %p75 = por %p73, %p74
      %p76 = scmp.ne.s32.totalorder %s65, %s68
      %p77 = scmp.eq.s32.totalorder %s18, 1
      %p78 = por %p76, %p77
      %p79 = scmp.ne.s32.totalorder %s68, %s69
      %p80 = scmp.eq.s32.totalorder %s18, 0
      %p81 = por %p79, %p80
      %p82 = scmp.ne.s32.totalorder %s68, %s69
      %p83 = scmp.eq.s32.totalorder %s19, 1
      %p84 = por %p82, %p83
      %p86 = scmp.ne.s32.totalorder %s69, %s85
      %p87 = scmp.eq.s32.totalorder %s19, 0
      %p88 = por %p86, %p87
      %p89 = scmp.le.s32.totalorder 1, %s13
      %p90 = scmp.lt.s32.totalorder %s13, 3
      %p91 = pnand %p89, %p90
      %p92 = pneg %p91
      // Predicated region
      $region9: #{tpu_custom_call.1} parent=5 // pred_check
        _
      $region10: #{tpu_custom_call.1} parent=5 // pred_check_branch
        %94 = sbr.rel (%p91) target = $region12
      $region11: #{tpu_custom_call.1} parent=5 // pred_region
        %s95 = ssub.s32 %s13, 1
      $region12: #{tpu_custom_call.1} parent=5 // pred_fallthru
        _
      %p96 = scmp.lt.s32.totalorder %s13, 2
      // Predicated region
      $region13: #{tpu_custom_call.1} parent=5 // pred_check
        %p97 = pneg %p96
      $region14: #{tpu_custom_call.1} parent=5 // pred_check_branch
        %99 = sbr.rel (%p97) target = $region16
      $region15: #{tpu_custom_call.1} parent=5 // pred_region
        // Predicated region
        $region17: #{tpu_custom_call.1} parent=15 // pred_check
          %p100 = pneg %p47
        $region18: #{tpu_custom_call.1} parent=15 // pred_check_branch
          %102 = sbr.rel (%p100) target = $region20
        $region19: #{tpu_custom_call.1} parent=15 // pred_region
          %s103 = sand.u32 %s37, 1
          %s104 = scalar_lea.sflag [#allocation3], %s103
          %s105 = sand.u32 %s37, 1
          %s106 = smul.addr %s105, 8
          %s107 = scalar_lea.vmem [#allocation2], %s106
          %s108 = smul.u32 2, %s21
          %110 = vsyncadd %s104, 0
          %s111 = smul.addr %s20, 2
          %s112 = sadd.s32 %s108, %s111
          %s113 = smul.addr %s112, 4
          %s114 = scalar_lea.hbm %s0, %s113
          %s116 = sshll.u32 %s114, 4
          %s117 = int_to_ptr.hbm [resolvable:$true] %s116
          %s118 = sshll.u32 %s107, 4
          %s119 = int_to_ptr.vmem [resolvable:$true] %s118
          %121 = dma.hbm_to_vmem [thread:$0]  %s117, 128, %s119, %s104
        $region20: #{tpu_custom_call.1} parent=15 // pred_fallthru
          _
      $region16: #{tpu_custom_call.1} parent=5 // pred_fallthru
        _
      %p122 = scmp.le.s32.totalorder 1, %s13
      %p123 = scmp.lt.s32.totalorder %s13, 3
      %p124 = pnand %p122, %p123
      %p125 = pneg %p124
      // Predicated region
      $region21: #{tpu_custom_call.1} parent=5 // pred_check
        _
      $region22: #{tpu_custom_call.1} parent=5 // pred_check_branch
        %127 = sbr.rel (%p124) target = $region24
      $region23: #{tpu_custom_call.1} parent=5 // pred_region
        %s128 = ssub.s32 %s13, 1
        %s129 = sand.u32 %s40, 1
        %s130 = scalar_lea.sflag [#allocation3], %s129
        %s131 = sand.u32 %s40, 1
        %s132 = smul.addr %s131, 8
        %s133 = scalar_lea.vmem [#allocation2], %s132
        // Predicated region
        $region25: #{tpu_custom_call.1} parent=23 // pred_check
          %p134 = pneg %p53
        $region26: #{tpu_custom_call.1} parent=23 // pred_check_branch
          %136 = sbr.rel (%p134) target = $region28
        $region27: #{tpu_custom_call.1} parent=23 // pred_region
          %138 = dma.done %s130, 128
        $region28: #{tpu_custom_call.1} parent=23 // pred_fallthru
          _
        %s139 = sand.u32 %s40, 1
        %s140 = scalar_lea.sflag [#allocation3], %s139
        %s141 = sand.u32 %s40, 1
        %s142 = smul.addr %s141, 8
        %s143 = scalar_lea.vmem [#allocation2], %s142
        %p144 = pneg %p53
        %p145 = pneg %p50
        %p146 = pneg %p81
        %p147 = pneg %p78
        %s148 = sand.u32 %s68, 1
        %s149 = scalar_lea.sflag [#allocation4], %s148
        %s150 = sand.u32 %s68, 1
        %s151 = smul.addr %s150, 8
        %s152 = scalar_lea.vmem [#allocation5], %s151
        %s153 = smul.u32 2, %s23
        %s154 = smul.u32 2, %s23
        %v155 = vld [vmem:[%s133] sm:$0xff]
        %v156 = vmul.f32 %v155, %v155
        %v157 = vmul.f32 %v155, %v156
        %v158 = vmul.f32 %v157, 0.044715
        %v159 = vadd.f32 %v155, %v158
        %v160 = vmul.f32 %v159, 0.7978846
        %v161 = vtanh.pop %v160
        %v162 = vadd.f32 %v161, 1.0
        %v163 = vmul.f32 %v162, 0.5
        %v164 = vmul.f32 %v155, %v163
        %v165 = vadd.f32 %v164, %v155
        %166 = vst [vmem:[%s152] sm:$0xff] %v165
        %s167 = sand.u32 %s68, 1
        %s168 = scalar_lea.sflag [#allocation4], %s167
        %s169 = sand.u32 %s68, 1
        %s170 = smul.addr %s169, 8
        %s171 = scalar_lea.vmem [#allocation5], %s170
        // Predicated region
        $region29: #{tpu_custom_call.1} parent=23 // pred_check
          %p172 = pneg %p78
        $region30: #{tpu_custom_call.1} parent=23 // pred_check_branch
          %174 = sbr.rel (%p172) target = $region32
        $region31: #{tpu_custom_call.1} parent=23 // pred_region
          %s175 = smul.u32 2, %s23
          %177 = vsyncadd %s168, 0
          %s178 = smul.addr %s22, 2
          %s179 = sadd.s32 %s175, %s178
          %s180 = smul.addr %s179, 4
          %s181 = scalar_lea.hbm %s1, %s180
          %s183 = sshll.u32 %s171, 4
          %s184 = int_to_ptr.vmem [resolvable:$true] %s183
          %s185 = sshll.u32 %s181, 4
          %s186 = int_to_ptr.hbm [resolvable:$true] %s185
          %188 = dma.vmem_to_hbm [thread:$0]  %s184, 128, %s186, %s168
        $region32: #{tpu_custom_call.1} parent=23 // pred_fallthru
          _
      $region24: #{tpu_custom_call.1} parent=5 // pred_fallthru
        _
      %p189 = scmp.le.s32.totalorder 2, %s13
      // Predicated region
      $region33: #{tpu_custom_call.1} parent=5 // pred_check
        %p190 = pneg %p189
      $region34: #{tpu_custom_call.1} parent=5 // pred_check_branch
        %192 = sbr.rel (%p190) target = $region36
      $region35: #{tpu_custom_call.1} parent=5 // pred_region
        %s193 = ssub.s32 %s13, 2
        // Predicated region
        $region37: #{tpu_custom_call.1} parent=35 // pred_check
          %p194 = pneg %p84
        $region38: #{tpu_custom_call.1} parent=35 // pred_check_branch
          %196 = sbr.rel (%p194) target = $region40
        $region39: #{tpu_custom_call.1} parent=35 // pred_region
          %s197 = sand.u32 %s69, 1
          %s198 = scalar_lea.sflag [#allocation4], %s197
          %s199 = sand.u32 %s69, 1
          %s200 = smul.addr %s199, 8
          %s201 = scalar_lea.vmem [#allocation5], %s200
          %203 = dma.done %s198, 128
        $region40: #{tpu_custom_call.1} parent=35 // pred_fallthru
          _
      $region36: #{tpu_custom_call.1} parent=5 // pred_fallthru
        _
    $region6: #{tpu_custom_call.1} parent=1 // loop_footer
      %s17 = sadd.s32 1, %s13
    $region7: #{tpu_custom_call.1} parent=1 // loop_footer_branch
      %12 = sbr.rel target = $region3
    $region8: #{tpu_custom_call.1} parent=1 // loop_exit
      _
    %204 = vsyncpa [#allocation3], 1
    %s205 = scalar_lea.sflag [#allocation3], 1
    %206 = vsyncpa %s205, 1
    %207 = vsyncpa [#allocation4], 1
    %s208 = scalar_lea.sflag [#allocation4], 1
    %209 = vsyncpa %s208, 1

</llo_original>
